<compile_context>
chip_gen: v6e
topology: v6e:2x2x1
jax: 0.10.0
libtpu: 0.0.40
codegen_flags: <defaults>
</compile_context>

<pallas_src>
import numpy as np

import jax
import jax.numpy as jnp
from jax.experimental import pallas as pl
from jax.experimental.pallas import tpu as pltpu


# ---------------------------------------------------------------------------
# Kernels
# ---------------------------------------------------------------------------

def _rope_kernel(pos_ref, inv_ref, cos_ref, sin_ref):
    """General path (dim >= 128, or irregular dims).

    pos_ref : (1, S_TILE)        float32
    inv_ref : (1, half)          float32
    cos_ref : (1, S_TILE, dim)   out dtype
    sin_ref : (1, S_TILE, dim)   out dtype
    """
    pos = pos_ref[...]            # (1, S_TILE)
    inv = inv_ref[...]            # (1, half)
    half = inv.shape[1]

    # Outer product on the VPU; `half` is small, MXU would only add overhead.
    freqs = pos[0][:, None] * inv                    # (S_TILE, half) f32

    # Trig only on the unique half (EUP work halved vs. trig on the concat).
    cf = jnp.cos(freqs)                              # (S_TILE, half) f32
    sf = jnp.sin(freqs)

    if half % 128 == 0:
        # Lane-aligned duplicate stores: no concat / relayout at all.
        cc = cf.astype(cos_ref.dtype)
        ss = sf.astype(sin_ref.dtype)
        cos_ref[0, :, :half] = cc
        cos_ref[0, :, half:] = cc
        sin_ref[0, :, :half] = ss
        sin_ref[0, :, half:] = ss
    else:
        # Duplicate the *result* (cheap copy, off the EUP path), one full-width
        # lane-dense store each.
        cos_ref[0] = jnp.concatenate([cf, cf], axis=-1).astype(cos_ref.dtype)
        sin_ref[0] = jnp.concatenate([sf, sf], axis=-1).astype(sin_ref.dtype)


def _rope_packed_kernel(pos_ref, invl_ref, cos_ref, sin_ref):
    """Lane-dense path for dim < 128: k = 128 // dim positions per output row,
    so every store is a full 128-lane vst (no masked partial stores) and every
    cos/sin runs on a fully populated vreg.

    pos_ref : (1, R_TILE, k)     float32  positions, k per packed row
    invl_ref: (1, 128)           float32  inv_freq duplicated + tiled to lanes
    cos_ref : (1, R_TILE, 128)   out dtype
    sin_ref : (1, R_TILE, 128)   out dtype
    """
    pos = pos_ref[0]              # (R_TILE, k) f32
    inv = invl_ref[...]           # (1, 128)
    r_tile, k = pos.shape
    lanes = inv.shape[1]
    dim = lanes // k

    # posrep[r, l] = pos[r, l // dim]; built with (k-1) lane-broadcasts +
    # selects against an in-kernel lane iota (VPU/XLU filler, off the EUP /
    # store critical path; no gid table DMA needed).
    lane = jax.lax.broadcasted_iota(jnp.int32, (1, lanes), 1)    # (1, 128)
    posrep = jnp.broadcast_to(pos[:, 0:1], (r_tile, lanes))
    for j in range(1, k):
        posrep = jnp.where(lane >= j * dim, pos[:, j:j + 1], posrep)

    freqs = posrep * inv                              # (R_TILE, 128) f32
    cos_ref[0] = jnp.cos(freqs).astype(cos_ref.dtype)
    sin_ref[0] = jnp.sin(freqs).astype(sin_ref.dtype)


# ---------------------------------------------------------------------------
# Wrapper
# ---------------------------------------------------------------------------

_VMEM_LIMIT_BYTES = 32 * 1024 * 1024  # explicit, with large headroom over blocks


def _row_cap(row_bytes):
    """Rows-per-tile cap: generation aware (v7x: 64 MiB VMEM) and bounded so
    double-buffered output blocks stay a small fraction of VMEM."""
    try:
        vmem = getattr(pltpu.get_tpu_info(), "vmem_capacity_bytes",
                       128 * 1024 * 1024)
    except Exception:
        vmem = 64 * 1024 * 1024           # conservative default
    base = 512 if vmem <= 64 * 1024 * 1024 else 1024
    budget = 2 * 1024 * 1024              # bytes per single output block
    return max(8, min(base, budget // max(1, row_bytes)))


def llama_rotary_embedding(x, position_ids, inv_freq, *, rows_per_tile=None):
    """Pallas implementation of LlamaRotaryEmbedding.forward.

    Returns (cos, sin), each (B, S, dim) in x.dtype.
    """
    B, S = position_ids.shape
    half = int(inv_freq.shape[0])
    dim = 2 * half
    out_dtype = x.dtype
    itemsize = jnp.dtype(out_dtype).itemsize

    pos_f32 = position_ids.astype(jnp.float32)

    # ---- batch dedup: cos/sin depend only on position_ids. When every batch
    # row is identical (checkable only with concrete values), compute one row
    # in the kernel and broadcast outside it (B x less EUP work + HBM writes).
    b_eff = B
    if B > 1:
        try:
            p_host = np.asarray(position_ids)      # raises for tracers
            if bool((p_host == p_host[:1]).all()):
                pos_f32 = pos_f32[:1]
                b_eff = 1
        except Exception:
            pass                                   # abstract values: keep B rows

    k = 128 // dim if (dim < 128 and 128 % dim == 0) else 1
    use_packed = (k > 1) and (S % k == 0)

    if use_packed:
        # -------- lane-dense packed path (dim < 128) --------
        lanes = k * dim                            # == 128
        rows = S // k
        cap = rows_per_tile if rows_per_tile is not None else _row_cap(lanes * itemsize)
        cap = max(8, (cap // 8) * 8)
        r_tile = rows if rows <= cap else cap
        grid = (b_eff, pl.cdiv(rows, r_tile))

        pos_packed = pos_f32.reshape(b_eff, rows, k)          # free reshape
        inv_lanes = jnp.tile(
            jnp.concatenate([inv_freq.astype(jnp.float32)] * 2), k
        ).reshape(1, lanes)

        out_shape = (jax.ShapeDtypeStruct((b_eff, rows, lanes), out_dtype),
                     jax.ShapeDtypeStruct((b_eff, rows, lanes), out_dtype))
        grid_spec = pltpu.PrefetchScalarGridSpec(
            num_scalar_prefetch=0,
            grid=grid,
            in_specs=[
                pl.BlockSpec((1, r_tile, k), lambda b, r: (b, r, 0)),
                pl.BlockSpec((1, lanes), lambda b, r: (0, 0)),
            ],
            out_specs=[
                pl.BlockSpec((1, r_tile, lanes), lambda b, r: (b, r, 0)),
                pl.BlockSpec((1, r_tile, lanes), lambda b, r: (b, r, 0)),
            ],
        )
        cos_p, sin_p = pl.pallas_call(
            _rope_packed_kernel,
            out_shape=out_shape,
            grid_spec=grid_spec,
            compiler_params=pltpu.CompilerParams(
                dimension_semantics=("parallel", "parallel"),
                vmem_limit_bytes=_VMEM_LIMIT_BYTES),
        )(pos_packed, inv_lanes)
        cos = cos_p.reshape(b_eff, S, dim)                    # free reshape
        sin = sin_p.reshape(b_eff, S, dim)
    else:
        # -------- general path (dim >= 128 already lane-dense) --------
        cap = rows_per_tile if rows_per_tile is not None else _row_cap(dim * itemsize)
        cap = max(128, (cap // 128) * 128)
        s_tile = S if S <= cap else cap
        grid = (b_eff, pl.cdiv(S, s_tile))

        inv_2d = inv_freq.astype(jnp.float32).reshape(1, half)

        out_shape = (jax.ShapeDtypeStruct((b_eff, S, dim), out_dtype),
                     jax.ShapeDtypeStruct((b_eff, S, dim), out_dtype))
        grid_spec = pltpu.PrefetchScalarGridSpec(
            num_scalar_prefetch=0,
            grid=grid,
            in_specs=[
                pl.BlockSpec((1, s_tile), lambda b, si: (b, si)),
                pl.BlockSpec((1, half), lambda b, si: (0, 0)),
            ],
            out_specs=[
                pl.BlockSpec((1, s_tile, dim), lambda b, si: (b, si, 0)),
                pl.BlockSpec((1, s_tile, dim), lambda b, si: (b, si, 0)),
            ],
        )
        cos, sin = pl.pallas_call(
            _rope_kernel,
            out_shape=out_shape,
            grid_spec=grid_spec,
            compiler_params=pltpu.CompilerParams(
                dimension_semantics=("parallel", "parallel"),
                vmem_limit_bytes=_VMEM_LIMIT_BYTES),
        )(pos_f32, inv_2d)

    if b_eff != B:
        cos = jnp.broadcast_to(cos, (B, S, dim))
        sin = jnp.broadcast_to(sin, (B, S, dim))
    return cos, sin


# ---------------------------------------------------------------------------
# Reference + tests
# ---------------------------------------------------------------------------

def _reference(x, position_ids, inv_freq):
    """Pure-JAX transcription of the PyTorch forward."""
    pos = position_ids.astype(jnp.float32)
    freqs = pos[:, :, None] * inv_freq.astype(jnp.float32)[None, None, :]
    emb = jnp.concatenate([freqs, freqs], axis=-1)
    return jnp.cos(emb).astype(x.dtype), jnp.sin(emb).astype(x.dtype)


def _make_inv_freq(dim, base=10000.0):
    return 1.0 / (base ** (jnp.arange(0, dim, 2, dtype=jnp.float32) / dim))


def _check(x, position_ids, inv_freq, rows_per_tile=None, tol=1e-4):
    cos, sin = llama_rotary_embedding(x, position_ids, inv_freq,
                                      rows_per_tile=rows_per_tile)
    cos, sin = jax.block_until_ready((cos, sin))
    cos_ref, sin_ref = _reference(x, position_ids, inv_freq)
    assert cos.shape == cos_ref.shape and sin.shape == sin_ref.shape
    assert cos.dtype == x.dtype and sin.dtype == x.dtype
    assert jnp.allclose(cos.astype(jnp.float32), cos_ref.astype(jnp.float32),
                        atol=tol, rtol=tol)
    assert jnp.allclose(sin.astype(jnp.float32), sin_ref.astype(jnp.float32),
                        atol=tol, rtol=tol)


if __name__ == "__main__":
    key = jax.random.PRNGKey(0)

    # 1) dim=32 (< 128): lane-dense packed path (k=4) + batch dedup.
    B, S, dim = 2, 8, 32
    inv = _make_inv_freq(dim)
    x = jax.random.normal(jax.random.fold_in(key, 1), (B, S, dim), dtype=jnp.float32)
    pos = jnp.tile(jnp.arange(S, dtype=jnp.int32)[None, :], (B, 1))
    _check(x, pos, inv, tol=1e-5)

    # 2) Llama head_dim=128: general path (concat store), distinct rows, bf16 out.
    B, S, dim = 2, 8, 128
    inv = _make_inv_freq(dim)
    x = jax.random.normal(jax.random.fold_in(key, 2), (B, S, dim)).astype(jnp.bfloat16)
    pos = jnp.stack([jnp.arange(S, dtype=jnp.int32),
                     jnp.arange(S, dtype=jnp.int32) + 5])
    _check(x, pos, inv, tol=2e-2)

    # 3) dim=256: general path with lane-aligned half-slice duplicate stores.
    B, S, dim = 1, 8, 256
    inv = _make_inv_freq(dim)
    x = jax.random.normal(jax.random.fold_in(key, 3), (B, S, dim), dtype=jnp.float32)
    pos = jnp.arange(S, dtype=jnp.int32)[None, :]
    _check(x, pos, inv)

    # 4) Multi-tile sequence grid on the general path (no dedup: rows differ).
    B, S, dim = 2, 256, 128
    inv = _make_inv_freq(dim)
    x = jax.random.normal(jax.random.fold_in(key, 4), (B, S, dim), dtype=jnp.float32)
    pos = jnp.stack([jnp.arange(S, dtype=jnp.int32),
                     jnp.arange(S, dtype=jnp.int32) + 3])
    _check(x, pos, inv, rows_per_tile=128)

    # 5) Multi-tile packed path (dim=64, k=2).
    B, S, dim = 1, 128, 64
    inv = _make_inv_freq(dim)
    x = jax.random.normal(jax.random.fold_in(key, 5), (B, S, dim), dtype=jnp.float32)
    pos = jnp.arange(S, dtype=jnp.int32)[None, :]
    _check(x, pos, inv, rows_per_tile=16)

    print("KERNEL_OK")
</pallas_src>

<mosaic_0001>
module attributes {stable_mosaic.version = 11 : i64} {
  func.func @_rope_packed_kernel(%arg0: i32, %arg1: i32, %arg2: memref<1x2x4xf32, #tpu.memory_space<vmem>>, %arg3: memref<1x128xf32, #tpu.memory_space<vmem>>, %arg4: memref<1x2x128xf32, #tpu.memory_space<vmem>>, %arg5: memref<1x2x128xf32, #tpu.memory_space<vmem>>) attributes {dimension_semantics = [#tpu.dimension_semantics<parallel>, #tpu.dimension_semantics<parallel>], iteration_bounds = array<i64: 1, 1>, scalar_prefetch = 0 : i64, scratch_operands = 0 : i64, tpu.core_type = #tpu.core_type<tc>, window_params = [{transform_indices = @transform_0, window_bounds = array<i64: 1, 2, 4>}, {pipeline_mode = #tpu.pipeline_mode<synchronous>, transform_indices = @transform_1, window_bounds = array<i64: 1, 128>}, {transform_indices = @transform_2, window_bounds = array<i64: 1, 2, 128>}, {transform_indices = @transform_3, window_bounds = array<i64: 1, 2, 128>}]} {
    %c0 = arith.constant 0 : index
    %c0_0 = arith.constant 0 : index
    %c0_1 = arith.constant 0 : index
    %0 = vector.load %arg2[%c0, %c0_0, %c0_1] : memref<1x2x4xf32, #tpu.memory_space<vmem>>, vector<1x2x4xf32>
    %1 = vector.shape_cast %0 : vector<1x2x4xf32> to vector<2x4xf32>
    %c0_2 = arith.constant 0 : index
    %c0_3 = arith.constant 0 : index
    %2 = vector.load %arg3[%c0_2, %c0_3] : memref<1x128xf32, #tpu.memory_space<vmem>>, vector<1x128xf32>
    %3 = tpu.iota {dimensions = array<i32: 1>} : vector<1x128xi32>
    %4 = vector.extract_strided_slice %1 {offsets = [0, 0], sizes = [2, 1], strides = [1, 1]} : vector<2x4xf32> to vector<2x1xf32>
    %5 = vector.shape_cast %4 : vector<2x1xf32> to vector<2x1xf32>
    %6 = vector.broadcast %5 : vector<2x1xf32> to vector<2x128xf32>
    %c32_i32 = arith.constant 32 : i32
    %7 = vector.broadcast %c32_i32 : i32 to vector<1x128xi32>
    %8 = arith.cmpi sge, %3, %7 : vector<1x128xi32>
    %9 = vector.extract_strided_slice %1 {offsets = [0, 1], sizes = [2, 1], strides = [1, 1]} : vector<2x4xf32> to vector<2x1xf32>
    %10 = vector.shape_cast %8 : vector<1x128xi1> to vector<1x128xi1>
    %11 = vector.broadcast %10 : vector<1x128xi1> to vector<2x128xi1>
    %12 = vector.shape_cast %9 : vector<2x1xf32> to vector<2x1xf32>
    %13 = vector.broadcast %12 : vector<2x1xf32> to vector<2x128xf32>
    %14 = arith.select %11, %13, %6 : vector<2x128xi1>, vector<2x128xf32>
    %c64_i32 = arith.constant 64 : i32
    %15 = vector.broadcast %c64_i32 : i32 to vector<1x128xi32>
    %16 = arith.cmpi sge, %3, %15 : vector<1x128xi32>
    %17 = vector.extract_strided_slice %1 {offsets = [0, 2], sizes = [2, 1], strides = [1, 1]} : vector<2x4xf32> to vector<2x1xf32>
    %18 = vector.shape_cast %16 : vector<1x128xi1> to vector<1x128xi1>
    %19 = vector.broadcast %18 : vector<1x128xi1> to vector<2x128xi1>
    %20 = vector.shape_cast %17 : vector<2x1xf32> to vector<2x1xf32>
    %21 = vector.broadcast %20 : vector<2x1xf32> to vector<2x128xf32>
    %22 = arith.select %19, %21, %14 : vector<2x128xi1>, vector<2x128xf32>
    %c96_i32 = arith.constant 96 : i32
    %23 = vector.broadcast %c96_i32 : i32 to vector<1x128xi32>
    %24 = arith.cmpi sge, %3, %23 : vector<1x128xi32>
    %25 = vector.extract_strided_slice %1 {offsets = [0, 3], sizes = [2, 1], strides = [1, 1]} : vector<2x4xf32> to vector<2x1xf32>
    %26 = vector.shape_cast %24 : vector<1x128xi1> to vector<1x128xi1>
    %27 = vector.broadcast %26 : vector<1x128xi1> to vector<2x128xi1>
    %28 = vector.shape_cast %25 : vector<2x1xf32> to vector<2x1xf32>
    %29 = vector.broadcast %28 : vector<2x1xf32> to vector<2x128xf32>
    %30 = arith.select %27, %29, %22 : vector<2x128xi1>, vector<2x128xf32>
    %31 = vector.broadcast %2 : vector<1x128xf32> to vector<2x128xf32>
    %32 = arith.mulf %30, %31 : vector<2x128xf32>
    %33 = math.cos %32 : vector<2x128xf32>
    %c0_4 = arith.constant 0 : index
    %c0_5 = arith.constant 0 : index
    %c0_6 = arith.constant 0 : index
    %34 = vector.load %arg4[%c0_4, %c0_5, %c0_6] : memref<1x2x128xf32, #tpu.memory_space<vmem>>, vector<1x2x128xf32>
    %35 = vector.shape_cast %34 : vector<1x2x128xf32> to vector<2x128xf32>
    %36 = vector.shape_cast %33 : vector<2x128xf32> to vector<1x2x128xf32>
    tpu.vector_store %arg4[%c0_4, %c0_5, %c0_6], %36 {strides = array<i32>} : memref<1x2x128xf32, #tpu.memory_space<vmem>>, vector<1x2x128xf32>,
    %37 = math.sin %32 : vector<2x128xf32>
    %c0_7 = arith.constant 0 : index
    %c0_8 = arith.constant 0 : index
    %c0_9 = arith.constant 0 : index
    %38 = vector.load %arg5[%c0_7, %c0_8, %c0_9] : memref<1x2x128xf32, #tpu.memory_space<vmem>>, vector<1x2x128xf32>
    %39 = vector.shape_cast %38 : vector<1x2x128xf32> to vector<2x128xf32>
    %40 = vector.shape_cast %37 : vector<2x128xf32> to vector<1x2x128xf32>
    tpu.vector_store %arg5[%c0_7, %c0_8, %c0_9], %40 {strides = array<i32>} : memref<1x2x128xf32, #tpu.memory_space<vmem>>, vector<1x2x128xf32>,
    return
  }
  func.func @transform_0(%arg0: i32, %arg1: i32) -> (i32, i32, i32) {
    %c0_i32 = arith.constant 0 : i32
    %c0_i32_0 = arith.constant 0 : i32
    return %arg0, %arg1, %c0_i32 : i32, i32, i32
  }
  func.func @transform_1(%arg0: i32, %arg1: i32) -> (i32, i32) {
    %c0_i32 = arith.constant 0 : i32
    %c0_i32_0 = arith.constant 0 : i32
    %c0_i32_1 = arith.constant 0 : i32
    return %c0_i32, %c0_i32_0 : i32, i32
  }
  func.func @transform_2(%arg0: i32, %arg1: i32) -> (i32, i32, i32) {
    %c0_i32 = arith.constant 0 : i32
    %c0_i32_0 = arith.constant 0 : i32
    return %arg0, %arg1, %c0_i32 : i32, i32, i32
  }
  func.func @transform_3(%arg0: i32, %arg1: i32) -> (i32, i32, i32) {
    %c0_i32 = arith.constant 0 : i32
    %c0_i32_0 = arith.constant 0 : i32
    return %arg0, %arg1, %c0_i32 : i32, i32, i32
  }
}

</mosaic_0001>

<llo_original>
// kernel: tpu_custom_call.1
$region0: #{tpu_custom_call.1}
  #allocation0 [shape = 'u32[]', space=smem, size = 0x4, offset = 0x4, fixed_abs, tag = 'smem constant byte address 0x4 - core index']
  #allocation1 [shape = 'u32[144,128]{1,0:T(1,128)}', space=vmem, size = 0x12000, scoped, tag = 'internal scratch']
  %s0 = inlined_call_operand.hbm [shape: f32[1,2,4], index: 0, kind: input, shape index: {}]
  %s1 = inlined_call_operand.vmem [shape: f32[1,128], index: 1, kind: input, shape index: {}]
  %s2 = inlined_call_operand.hbm [shape: f32[1,2,128], index: 2, kind: output, shape index: {0}]
  %s3 = inlined_call_operand.hbm [shape: f32[1,2,128], index: 3, kind: output, shape index: {1}]
  %4 = xla_tuple %s2, %s3
  %s5 = sld [smem:[#allocation0]]
  $region30: #{tpu_custom_call.1} parent=0
    _
  %s7 = ssub.s32 1, %s5
  %s8 = scalar_select 0, %s7, %s5
  $region1: #{tpu_custom_call.1} parent=0
    #allocation2 [shape = 'u8[1024]{0}', space=vmem, size = 0x400, scoped, tag = 'input window, operand 0, single buffered']
    #allocation3 [shape = 's32[1]{0}', space=sflag, size = 0x4, scoped, tag = 'scoped memory for tpu_custom_call.1']
    #allocation4 [shape = 's32[1]{0}', space=sflag, size = 0x4, scoped, tag = 'scoped memory for tpu_custom_call.1']
    #allocation5 [shape = 'u8[1024]{0}', space=vmem, size = 0x400, scoped, tag = 'output window, operand 0, single buffered']
    #allocation6 [shape = 'u8[1024]{0}', space=vmem, size = 0x400, scoped, tag = 'output window, operand 1, single buffered']
    #allocation7 [shape = 's32[1]{0}', space=sflag, size = 0x4, scoped, tag = 'scoped memory for tpu_custom_call.1']
    %9 = vsyncpa [#allocation3], 0
    %10 = vsyncpa [#allocation4], 0
    %11 = vsyncpa [#allocation7], 0
    // Predicated region
    $region2: #{tpu_custom_call.1} parent=1 // pred_check
      _
    $region3: #{tpu_custom_call.1} parent=1 // pred_check_branch
      %13 = sbr.rel (0) target = $region5
    $region4: #{tpu_custom_call.1} parent=1 // pred_region
      %s15 = ssub.s32 32, 32
      %16 = vsyncadd [#allocation3], %s15
      %s18 = sshll.u32 [#allocation2], 4
      %s19 = int_to_ptr.vmem [resolvable:$true] %s18
      %21 = dma.hbm_to_vmem [thread:$0]  %s0, 32, %s19, [#allocation3]
    $region5: #{tpu_custom_call.1} parent=1 // pred_fallthru
      _
    // Predicated region
    $region6: #{tpu_custom_call.1} parent=1 // pred_check
      _
    $region7: #{tpu_custom_call.1} parent=1 // pred_check_branch
      %23 = sbr.rel (0) target = $region9
    $region8: #{tpu_custom_call.1} parent=1 // pred_region
      _
    $region9: #{tpu_custom_call.1} parent=1 // pred_fallthru
      _
    // Predicated region
    $region10: #{tpu_custom_call.1} parent=1 // pred_check
      _
    $region11: #{tpu_custom_call.1} parent=1 // pred_check_branch
      %25 = sbr.rel (0) target = $region13
    $region12: #{tpu_custom_call.1} parent=1 // pred_region
      %26 = dma.done [#allocation3], 32
    $region13: #{tpu_custom_call.1} parent=1 // pred_fallthru
      _
    %v27 = vld [vmem:[#allocation2] sm:$0x3]
    %v28 = vld [vmem:[%s1] sm:$0x1]
    %v29 = vlaneseq
    %v30 = vand.u32 %v29, 127
    %32 = vset.pattern.permute.xlu0 0
    %33 = vperm.xlu0 %32, %v27
    %v34 = vpop.permute.xlu0 %33
    %vm36 = vcmp.ge.s32.totalorder %v30, 32
    %v37 = vsel %vm36, 1, 0
    %vm38 = vcmp.eq.s32.totalorder %v37, 1
    %39 = vset.pattern.permute.xlu0 1
    %40 = vperm.xlu0 %39, %v27
    %v41 = vpop.permute.xlu0 %40
    %v43 = vsel %vm38, %v41, %v34
    %vm44 = vcmp.ge.s32.totalorder %v30, 64
    %v45 = vsel %vm44, 1, 0
    %vm46 = vcmp.eq.s32.totalorder %v45, 1
    %47 = vset.pattern.permute.xlu0 2
    %48 = vperm.xlu0 %47, %v27
    %v49 = vpop.permute.xlu0 %48
    %v51 = vsel %vm46, %v49, %v43
    %vm52 = vcmp.ge.s32.totalorder %v30, 96
    %v53 = vsel %vm52, 1, 0
    %vm54 = vcmp.eq.s32.totalorder %v53, 1
    %55 = vset.pattern.permute.xlu0 3
    %56 = vperm.xlu0 %55, %v27
    %v57 = vpop.permute.xlu0 %56
    %v59 = vsel %vm54, %v57, %v51
    %v61 = vlaneseq
    %v62 = vshrl.u32 %v61, 7
    %v63 = vsub.s32 0, %v62
    %v64 = vrot.slane %v28, %v63
    %v66 = vmul.f32 %v59, %v64
    %v67 = vand.u32 2147483647, %v66
    %vm68 = vcmp.le.f32.partialorder %v67, 0.7853982
    %vm69 = vcmp.lt.s32.totalorder %v66, 0
    %v70 = vand.u32 %v66, 2139095040
    %v71 = vshrl.u32 %v70, 23
    %v72 = vsub.s32 %v71, 127
    %v73 = vand.u32 2147483647, %v66
    %v74 = vand.u32 %v73, 8388607
    %v75 = vor.u32 %v74, 8388608
    %v76 = vsub.s32 0, %v75
    %v77 = vadd.s32 %v72, 1
    %vm78 = vcmp.gt.s32.totalorder %v77, 0
    %v79 = vsel %vm78, %v77, 0
    %v80 = vshrl.u32 %v79, 5
    %v81 = vand.u32 %v79, 31
    %v82 = vsub.s32 32, %v81
    %v83 = vshrl.u32 683565275, %v82
    %v84 = vshll.u32 683565275, %v81
    %v85 = vshrl.u32 2475754826, %v82
    %v86 = vor.u32 %v84, %v85
    %v87 = vshll.u32 2475754826, %v81
    %v88 = vshrl.u32 2131351028, %v82
    %v89 = vor.u32 %v87, %v88
    %v90 = vshll.u32 2131351028, %v81
    %v91 = vshrl.u32 2102212464, %v82
    %v92 = vor.u32 %v90, %v91
    %v93 = vshll.u32 2102212464, %v81
    %v94 = vshrl.u32 920167782, %v82
    %v95 = vor.u32 %v93, %v94
    %v96 = vshll.u32 920167782, %v81
    %v97 = vshrl.u32 1326507024, %v82
    %v98 = vor.u32 %v96, %v97
    %vm99 = vcmp.lt.s32.totalorder %v80, 1
    %vm100 = vcmp.lt.s32.totalorder %v80, 2
    %vm101 = vcmp.lt.s32.totalorder %v80, 3
    %vm102 = vcmp.lt.s32.totalorder %v80, 4
    %v103 = vsel %vm99, %v83, %v86
    %v104 = vsel %vm102, %v92, 2102212464
    %v105 = vsel %vm101, %v89, %v104
    %v106 = vsel %vm100, %v103, %v105
    %v107 = vsel %vm99, %v86, %v89
    %v108 = vsel %vm102, %v95, 920167782
    %v109 = vsel %vm101, %v92, %v108
    %v110 = vsel %vm100, %v107, %v109
    %v111 = vsel %vm99, %v89, %v92
    %v112 = vsel %vm102, %v98, 1326507024
    %v113 = vsel %vm101, %v95, %v112
    %v114 = vsel %vm100, %v111, %v113
    %v115 = vshll.u32 %v75, 8
    %v116 = vmul.u32.u64.compose %v115, %v114
    %v117 = vextract.low.u32 %v116
    %v118 = vextract.high.u32 %v116
    %v119 = vmul.u32.u64.compose %v115, %v110
    %v120 = vextract.low.u32 %v119
    %v121 = vextract.high.u32 %v119
    %v122 = vmul.u32 %v115, %v106
    %v123 = vadd.s32 %v118, %v120
    %vm124 = vc.u32 %v118, %v120
    %v125 = vadd.s32 %v121, 1
    %v126 = vsel %vm124, %v125, %v121
    %v127 = vadd.s32 %v122, %v126
    %v128 = vadd.s32 %v127, 536870912
    %v129 = vshrl.u32 %v128, 30
    %v130 = vshll.u32 %v129, 30
    %v131 = vsub.s32 %v127, %v130
    %vm132 = vcmp.lt.s32.totalorder %v131, 0
    %v133 = vsub.s32 0, %v131
    %v134 = vsel %vm132, %v133, %v131
    %v135 = vclz %v134
    %v136 = vsub.s32 %v135, 2
    %vm137 = vcmp.gt.s32.totalorder 0, %v136
    %v138 = vsel %vm137, 0, %v136
    %v139 = vsub.s32 32, %v138
    %v140 = vshll.u32 %v131, %v138
    %v141 = vshrl.u32 %v123, %v139
    %v142 = vor.u32 %v140, %v141
    %v143 = vsub.s32 4294967266, %v138
    %v144 = vadd.s32 %v143, 127
    %v145 = vshll.u32 %v144, 23
    %v146 = vor.u32 4788187, %v145
    %v147 = vand.u32 2147483647, %v146
    %v149 = vcvt.s32.f32 %v142
    %v150 = vmul.f32 %v149, %v147
    %v151 = vxor.u32 %v150, 2147483648
    %v152 = vsel %vm69, %v151, %v150
    %v153 = vsub.s32 4, %v129
    %v154 = vsel %vm69, %v153, %v129
    %v155 = vsel %vm68, %v66, %v152
    %v156 = vsel %vm68, 0, %v154
    %v157 = vcosq.f32.pop %v155
    %v158 = vsinq.f32.pop %v155
    %vm159 = vweird.f32 %v66
    %v160 = vand.u32 %v156, 3
    %vm161 = vcmp.lt.s32.totalorder %v160, 2
    %vm162 = vcmp.eq.s32.totalorder %v160, 0
    %v163 = vxor.u32 %v158, 2147483648
    %v164 = vsel %vm162, %v157, %v163
    %vm165 = vcmp.eq.s32.totalorder %v160, 2
    %v166 = vxor.u32 %v157, 2147483648
    %v167 = vsel %vm165, %v166, %v158
    %v168 = vsel %vm161, %v164, %v167
    %v169 = vsel %vm159, nan, %v168
    %170 = vst [vmem:[#allocation5] sm:$0x3] %v169
    %v171 = vand.u32 2147483647, %v66
    %vm172 = vcmp.le.f32.partialorder %v171, 0.7853982
    %vm173 = vcmp.lt.s32.totalorder %v66, 0
    %v174 = vand.u32 %v66, 2139095040
    %v175 = vshrl.u32 %v174, 23
    %v176 = vsub.s32 %v175, 127
    %v177 = vand.u32 2147483647, %v66
    %v178 = vand.u32 %v177, 8388607
    %v179 = vor.u32 %v178, 8388608
    %v180 = vsub.s32 0, %v179
    %v181 = vadd.s32 %v176, 1
    %vm182 = vcmp.gt.s32.totalorder %v181, 0
    %v183 = vsel %vm182, %v181, 0
    %v184 = vshrl.u32 %v183, 5
    %v185 = vand.u32 %v183, 31
    %v186 = vsub.s32 32, %v185
    %v187 = vshrl.u32 683565275, %v186
    %v188 = vshll.u32 683565275, %v185
    %v189 = vshrl.u32 2475754826, %v186
    %v190 = vor.u32 %v188, %v189
    %v191 = vshll.u32 2475754826, %v185
    %v192 = vshrl.u32 2131351028, %v186
    %v193 = vor.u32 %v191, %v192
    %v194 = vshll.u32 2131351028, %v185
    %v195 = vshrl.u32 2102212464, %v186
    %v196 = vor.u32 %v194, %v195
    %v197 = vshll.u32 2102212464, %v185
    %v198 = vshrl.u32 920167782, %v186
    %v199 = vor.u32 %v197, %v198
    %v200 = vshll.u32 920167782, %v185
    %v201 = vshrl.u32 1326507024, %v186
    %v202 = vor.u32 %v200, %v201
    %vm203 = vcmp.lt.s32.totalorder %v184, 1
    %vm204 = vcmp.lt.s32.totalorder %v184, 2
    %vm205 = vcmp.lt.s32.totalorder %v184, 3
    %vm206 = vcmp.lt.s32.totalorder %v184, 4
    %v207 = vsel %vm203, %v187, %v190
    %v208 = vsel %vm206, %v196, 2102212464
    %v209 = vsel %vm205, %v193, %v208
    %v210 = vsel %vm204, %v207, %v209
    %v211 = vsel %vm203, %v190, %v193
    %v212 = vsel %vm206, %v199, 920167782
    %v213 = vsel %vm205, %v196, %v212
    %v214 = vsel %vm204, %v211, %v213
    %v215 = vsel %vm203, %v193, %v196
    %v216 = vsel %vm206, %v202, 1326507024
    %v217 = vsel %vm205, %v199, %v216
    %v218 = vsel %vm204, %v215, %v217
    %v219 = vshll.u32 %v179, 8
    %v220 = vmul.u32.u64.compose %v219, %v218
    %v221 = vextract.low.u32 %v220
    %v222 = vextract.high.u32 %v220
    %v223 = vmul.u32.u64.compose %v219, %v214
    %v224 = vextract.low.u32 %v223
    %v225 = vextract.high.u32 %v223
    %v226 = vmul.u32 %v219, %v210
    %v227 = vadd.s32 %v222, %v224
    %vm228 = vc.u32 %v222, %v224
    %v229 = vadd.s32 %v225, 1
    %v230 = vsel %vm228, %v229, %v225
    %v231 = vadd.s32 %v226, %v230
    %v232 = vadd.s32 %v231, 536870912
    %v233 = vshrl.u32 %v232, 30
    %v234 = vshll.u32 %v233, 30
    %v235 = vsub.s32 %v231, %v234
    %vm236 = vcmp.lt.s32.totalorder %v235, 0
    %v237 = vsub.s32 0, %v235
    %v238 = vsel %vm236, %v237, %v235
    %v239 = vclz %v238
    %v240 = vsub.s32 %v239, 2
    %vm241 = vcmp.gt.s32.totalorder 0, %v240
    %v242 = vsel %vm241, 0, %v240
    %v243 = vsub.s32 32, %v242
    %v244 = vshll.u32 %v235, %v242
    %v245 = vshrl.u32 %v227, %v243
    %v246 = vor.u32 %v244, %v245
    %v247 = vsub.s32 4294967266, %v242
    %v248 = vadd.s32 %v247, 127
    %v249 = vshll.u32 %v248, 23
    %v250 = vor.u32 4788187, %v249
    %v251 = vand.u32 2147483647, %v250
    %v253 = vcvt.s32.f32 %v246
    %v254 = vmul.f32 %v253, %v251
    %v255 = vxor.u32 %v254, 2147483648
    %v256 = vsel %vm173, %v255, %v254
    %v257 = vsub.s32 4, %v233
    %v258 = vsel %vm173, %v257, %v233
    %v259 = vsel %vm172, %v66, %v256
    %v260 = vsel %vm172, 0, %v258
    %v261 = vcosq.f32.pop %v259
    %v262 = vsinq.f32.pop %v259
    %vm263 = vweird.f32 %v66
    %v264 = vadd.s32 %v260, 3
    %v265 = vand.u32 %v264, 3
    %vm266 = vcmp.lt.s32.totalorder %v265, 2
    %vm267 = vcmp.eq.s32.totalorder %v265, 0
    %v268 = vxor.u32 %v262, 2147483648
    %v269 = vsel %vm267, %v261, %v268
    %vm270 = vcmp.eq.s32.totalorder %v265, 2
    %v271 = vxor.u32 %v261, 2147483648
    %v272 = vsel %vm270, %v271, %v262
    %v273 = vsel %vm266, %v269, %v272
    %v274 = vsel %vm263, nan, %v273
    %275 = vst [vmem:[#allocation6] sm:$0x3] %v274
    // Predicated region
    $region14: #{tpu_custom_call.1} parent=1 // pred_check
      _
    $region15: #{tpu_custom_call.1} parent=1 // pred_check_branch
      %277 = sbr.rel (0) target = $region17
    $region16: #{tpu_custom_call.1} parent=1 // pred_region
      %s279 = ssub.s32 32, 32
      %280 = vsyncadd [#allocation4], %s279
      %s282 = sshll.u32 [#allocation5], 4
      %s283 = int_to_ptr.vmem [resolvable:$true] %s282
      %285 = dma.vmem_to_hbm [thread:$0]  %s283, 32, %s2, [#allocation4]
    $region17: #{tpu_custom_call.1} parent=1 // pred_fallthru
      _
    // Predicated region
    $region18: #{tpu_custom_call.1} parent=1 // pred_check
      _
    $region19: #{tpu_custom_call.1} parent=1 // pred_check_branch
      %287 = sbr.rel (0) target = $region21
    $region20: #{tpu_custom_call.1} parent=1 // pred_region
      %s289 = ssub.s32 32, 32
      %290 = vsyncadd [#allocation7], %s289
      %s292 = sshll.u32 [#allocation6], 4
      %s293 = int_to_ptr.vmem [resolvable:$true] %s292
      %295 = dma.vmem_to_hbm [thread:$0]  %s293, 32, %s3, [#allocation7]
    $region21: #{tpu_custom_call.1} parent=1 // pred_fallthru
      _
    // Predicated region
    $region22: #{tpu_custom_call.1} parent=1 // pred_check
      _
    $region23: #{tpu_custom_call.1} parent=1 // pred_check_branch
      %297 = sbr.rel (0) target = $region25
    $region24: #{tpu_custom_call.1} parent=1 // pred_region
      %298 = dma.done [#allocation4], 32
    $region25: #{tpu_custom_call.1} parent=1 // pred_fallthru
      _
    // Predicated region
    $region26: #{tpu_custom_call.1} parent=1 // pred_check
      _
    $region27: #{tpu_custom_call.1} parent=1 // pred_check_branch
      %300 = sbr.rel (0) target = $region29
    $region28: #{tpu_custom_call.1} parent=1 // pred_region
      %301 = dma.done [#allocation7], 32
    $region29: #{tpu_custom_call.1} parent=1 // pred_fallthru
      _
    %302 = vsyncpa [#allocation3], 1
    %303 = vsyncpa [#allocation4], 1
    %304 = vsyncpa [#allocation7], 1

</llo_original>
